<compile_context>
chip_gen: v6e
topology: v6e:2x2x1
jax: 0.10.0
libtpu: 0.0.40
codegen_flags: <defaults>
</compile_context>

<pallas_src>
import jax
import jax.numpy as jnp
from jax.experimental import pallas as pl
from jax.experimental.pallas import tpu as pltpu

LANE = 128


def _round_up(x, m):
    return (x + m - 1) // m * m


# ---------------------------------------------------------------------------
# Kernel
# ---------------------------------------------------------------------------
def fusion_head_kernel(xt_ref, xi_ref,      # activations (f32): [tb, 768], [tb, 1000]
                       w1_ref, b1_ref,      # text_trans Linear(768, H_pad)  (bf16 / f32)
                       wt_ref,              # folded wf_t @ wo   [H_pad, C_pad]  bf16
                       wi_ref,              # folded w2@wf_i@wo  [1000,  C_pad]  bf16
                       ball_ref,            # folded bias        [1,     C_pad]  f32
                       out_ref):            # [tb, C_pad] bf16
    # f32 -> bf16 casts on the VPU (free in this HBM-bound kernel); f32 MXU accumulation.
    xt = xt_ref[...].astype(w1_ref.dtype)
    xi = xi_ref[...].astype(wi_ref.dtype)

    # text branch: Dropout(eval) = identity -> Linear -> ReLU (bias/ReLU epilogue in f32)
    t = jnp.dot(xt, w1_ref[...], preferred_element_type=jnp.float32)
    t = jnp.maximum(t + b1_ref[...], 0.0)

    # folded fusion + output layers
    o = jnp.dot(t.astype(wt_ref.dtype), wt_ref[...], preferred_element_type=jnp.float32)
    o += jnp.dot(xi, wi_ref[...], preferred_element_type=jnp.float32)
    o += ball_ref[...]
    out_ref[...] = o.astype(out_ref.dtype)


# ---------------------------------------------------------------------------
# Wrapper: fold + pad parameters once, then tiled pallas_call over the batch.
# ---------------------------------------------------------------------------
def fold_and_pad_params(p, compute_dtype=jnp.bfloat16):
    H = p["b1"].shape[-1]
    C = p["bo"].shape[-1]
    K_txt = p["w1"].shape[0]                 # 768
    K_img = p["w2"].shape[0]                 # 1000
    H_pad = _round_up(H, LANE)
    C_pad = _round_up(C, LANE)

    # exact algebra (image path and post-fusion path are purely affine in eval mode)
    w_txt = p["wf_t"] @ p["wo"]                                           # [H, C]
    w_img = p["w2"] @ p["wf_i"] @ p["wo"]                                 # [1000, C]
    b_all = p["b2"] @ p["wf_i"] @ p["wo"] + p["bf"] @ p["wo"] + p["bo"]   # [1, C]

    def pad2(a, r, c):
        return jnp.pad(a, ((0, r - a.shape[0]), (0, c - a.shape[1])))

    return {
        "w1": pad2(p["w1"], K_txt, H_pad).astype(compute_dtype),
        "b1": pad2(p["b1"], 1, H_pad).astype(jnp.float32),
        "w_txt": pad2(w_txt, H_pad, C_pad).astype(compute_dtype),
        "w_img": pad2(w_img, K_img, C_pad).astype(compute_dtype),   # keep K=1000, pad lanes only
        "b_all": pad2(b_all, 1, C_pad).astype(jnp.float32),
        "dims": (H, C, K_txt, K_img, H_pad, C_pad),
    }


def _pick_tile_b(B, tile_b):
    # At least two grid steps for larger batches so the "parallel" axis can shard
    # across both TensorCores on v7x; 256-multiples match the 2x256x256 MXU.
    if B >= 2 * 128:
        tile_b = min(tile_b, _round_up(-(-B // 2), 256))
    # Small batches: round to 16-row multiples (bf16 sublane packing on v5e).
    return max(16, min(tile_b, _round_up(B, 16)))


def fusion_head(text_feat, image_feat, fp, *, tile_b=512, out_dtype=jnp.bfloat16):
    """text_feat: [B, 768] f32 BERT pooler output; image_feat: [B, 1000] f32 resnet50 output."""
    _, C, K_txt, K_img, H_pad, C_pad = fp["dims"]
    B = text_feat.shape[0]

    tile_b = _pick_tile_b(B, tile_b)
    grid = (pl.cdiv(B, tile_b),)

    in_specs = [
        pl.BlockSpec((tile_b, K_txt), lambda i: (i, 0)),   # xt tile (f32)
        pl.BlockSpec((tile_b, K_img), lambda i: (i, 0)),   # xi tile (f32, full 1000-wide)
        pl.BlockSpec((K_txt, H_pad), lambda i: (0, 0)),    # w1 (resident)
        pl.BlockSpec((1, H_pad), lambda i: (0, 0)),        # b1 (resident)
        pl.BlockSpec((H_pad, C_pad), lambda i: (0, 0)),    # w_txt (resident)
        pl.BlockSpec((K_img, C_pad), lambda i: (0, 0)),    # w_img (resident)
        pl.BlockSpec((1, C_pad), lambda i: (0, 0)),        # b_all (resident)
    ]
    out_spec = pl.BlockSpec((tile_b, C_pad), lambda i: (i, 0))

    flops = 2 * B * (K_txt * H_pad + H_pad * C_pad + K_img * C_pad)
    bytes_accessed = (
        B * (K_txt + K_img) * 4                                    # f32 activation reads
        + (K_txt * H_pad + H_pad * C_pad + K_img * C_pad) * 2      # bf16 weights (resident)
        + (H_pad + C_pad) * 4                                      # f32 biases
        + B * C_pad * jnp.dtype(out_dtype).itemsize                # output writeback
    )

    out = pl.pallas_call(
        fusion_head_kernel,
        out_shape=jax.ShapeDtypeStruct((B, C_pad), out_dtype),
        grid=grid,
        in_specs=in_specs,
        out_specs=out_spec,
        compiler_params=pltpu.CompilerParams(
            dimension_semantics=("parallel",),
            vmem_limit_bytes=32 * 1024 * 1024,
        ),
        cost_estimate=pl.CostEstimate(
            flops=flops, transcendentals=0, bytes_accessed=int(bytes_accessed)),
    )(text_feat, image_feat, fp["w1"], fp["b1"], fp["w_txt"], fp["w_img"], fp["b_all"])

    # Slice away lane padding on C (edge-block garbage rows beyond B are never written).
    return out[:B, :C]


# ---------------------------------------------------------------------------
# Param init (PyTorch nn.Linear default: U[-1/sqrt(fan_in), +1/sqrt(fan_in)])
# and pure-JAX unfused reference for correctness checking.
# ---------------------------------------------------------------------------
def init_params(key, hidden_size, num_classes):
    def linear(k, fan_in, fan_out):
        kw, kb = jax.random.split(k)
        bound = 1.0 / jnp.sqrt(fan_in)
        w = jax.random.uniform(kw, (fan_in, fan_out), jnp.float32, -bound, bound)
        b = jax.random.uniform(kb, (1, fan_out), jnp.float32, -bound, bound)
        return w, b

    k1, k2, k3, k4 = jax.random.split(key, 4)
    w1, b1 = linear(k1, 768, hidden_size)               # text_trans Linear
    w2, b2 = linear(k2, 1000, hidden_size)              # resnet_fc
    wf, bf = linear(k3, 2 * hidden_size, hidden_size)   # fusion_layer
    wo, bo = linear(k4, hidden_size, num_classes)       # output_layer
    return {
        "w1": w1, "b1": b1,
        "w2": w2, "b2": b2,
        "wf_t": wf[:hidden_size, :], "wf_i": wf[hidden_size:, :], "bf": bf,
        "wo": wo, "bo": bo,
    }


def reference(text_feat, image_feat, p):
    t = jnp.maximum(text_feat @ p["w1"] + p["b1"], 0.0)
    im = image_feat @ p["w2"] + p["b2"]
    fused = jnp.concatenate([t, im], axis=1)
    wf = jnp.concatenate([p["wf_t"], p["wf_i"]], axis=0)
    f = fused @ wf + p["bf"]
    return f @ p["wo"] + p["bo"]


if __name__ == "__main__":
    B, H, C = 8, 32, 8
    key = jax.random.PRNGKey(0)
    k_params, k_text, k_img = jax.random.split(key, 3)

    params = init_params(k_params, hidden_size=H, num_classes=C)

    # Stand-ins for backbone outputs (backbones themselves are not translated):
    text_features = jax.random.normal(k_text, (B, 768), jnp.float32)    # BERT pooler_output
    image_features = jax.random.normal(k_img, (B, 1000), jnp.float32)   # resnet50 output

    folded = fold_and_pad_params(params)
    out = fusion_head(text_features, image_features, folded)
    out = jax.block_until_ready(out)

    ref = reference(text_features, image_features, params)
    assert out.shape == (B, C)
    # bf16 weights/output + folded weights => relaxed tolerance vs f32 reference.
    assert jnp.allclose(out.astype(jnp.float32), ref, atol=3e-2, rtol=3e-2), \
        "mismatch vs. pure-JAX reference"

    print("KERNEL_OK")
</pallas_src>

<mosaic_0001>
module attributes {stable_mosaic.version = 11 : i64} {
  func.func @fusion_head_kernel(%arg0: i32, %arg1: memref<16x768xf32, #tpu.memory_space<vmem>>, %arg2: memref<16x1000xf32, #tpu.memory_space<vmem>>, %arg3: memref<768x128xbf16, #tpu.memory_space<vmem>>, %arg4: memref<1x128xf32, #tpu.memory_space<vmem>>, %arg5: memref<128x128xbf16, #tpu.memory_space<vmem>>, %arg6: memref<1000x128xbf16, #tpu.memory_space<vmem>>, %arg7: memref<1x128xf32, #tpu.memory_space<vmem>>, %arg8: memref<16x128xbf16, #tpu.memory_space<vmem>>) attributes {dimension_semantics = [#tpu.dimension_semantics<parallel>], iteration_bounds = array<i64: 1>, scalar_prefetch = 0 : i64, scratch_operands = 0 : i64, tpu.core_type = #tpu.core_type<tc>, window_params = [{transform_indices = @transform_0, window_bounds = array<i64: 16, 768>}, {transform_indices = @transform_1, window_bounds = array<i64: 16, 1000>}, {pipeline_mode = #tpu.pipeline_mode<synchronous>, transform_indices = @transform_2, window_bounds = array<i64: 768, 128>}, {pipeline_mode = #tpu.pipeline_mode<synchronous>, transform_indices = @transform_3, window_bounds = array<i64: 1, 128>}, {pipeline_mode = #tpu.pipeline_mode<synchronous>, transform_indices = @transform_4, window_bounds = array<i64: 128, 128>}, {pipeline_mode = #tpu.pipeline_mode<synchronous>, transform_indices = @transform_5, window_bounds = array<i64: 1000, 128>}, {pipeline_mode = #tpu.pipeline_mode<synchronous>, transform_indices = @transform_6, window_bounds = array<i64: 1, 128>}, {transform_indices = @transform_7, window_bounds = array<i64: 16, 128>}]} {
    %c0 = arith.constant 0 : index
    %c0_0 = arith.constant 0 : index
    %0 = vector.load %arg1[%c0, %c0_0] : memref<16x768xf32, #tpu.memory_space<vmem>>, vector<16x768xf32>
    %1 = arith.truncf %0 : vector<16x768xf32> to vector<16x768xbf16>
    %c0_1 = arith.constant 0 : index
    %c0_2 = arith.constant 0 : index
    %2 = vector.load %arg2[%c0_1, %c0_2] : memref<16x1000xf32, #tpu.memory_space<vmem>>, vector<16x1000xf32>
    %3 = arith.truncf %2 : vector<16x1000xf32> to vector<16x1000xbf16>
    %c0_3 = arith.constant 0 : index
    %c0_4 = arith.constant 0 : index
    %4 = vector.load %arg3[%c0_3, %c0_4] : memref<768x128xbf16, #tpu.memory_space<vmem>>, vector<768x128xbf16>
    %cst = arith.constant dense<0.000000e+00> : vector<16x128xf32>
    %5 = tpu.matmul %1, %4, %cst {dimension_numbers = #tpu.dot_dimension_numbers<[1], [0], [0], [1], [0, 0, 1, 1], [], []>} : vector<16x768xbf16>, vector<768x128xbf16>, vector<16x128xf32> -> vector<16x128xf32>
    %c0_5 = arith.constant 0 : index
    %c0_6 = arith.constant 0 : index
    %6 = vector.load %arg4[%c0_5, %c0_6] : memref<1x128xf32, #tpu.memory_space<vmem>>, vector<1x128xf32>
    %7 = vector.broadcast %6 : vector<1x128xf32> to vector<16x128xf32>
    %8 = arith.addf %5, %7 : vector<16x128xf32>
    %cst_7 = arith.constant 0.000000e+00 : f32
    %9 = vector.broadcast %cst_7 : f32 to vector<16x128xf32>
    %10 = arith.maximumf %8, %9 : vector<16x128xf32>
    %11 = arith.truncf %10 : vector<16x128xf32> to vector<16x128xbf16>
    %c0_8 = arith.constant 0 : index
    %c0_9 = arith.constant 0 : index
    %12 = vector.load %arg5[%c0_8, %c0_9] : memref<128x128xbf16, #tpu.memory_space<vmem>>, vector<128x128xbf16>
    %cst_10 = arith.constant dense<0.000000e+00> : vector<16x128xf32>
    %13 = tpu.matmul %11, %12, %cst_10 {dimension_numbers = #tpu.dot_dimension_numbers<[1], [0], [0], [1], [0, 0, 1, 1], [], []>} : vector<16x128xbf16>, vector<128x128xbf16>, vector<16x128xf32> -> vector<16x128xf32>
    %c0_11 = arith.constant 0 : index
    %c0_12 = arith.constant 0 : index
    %14 = vector.load %arg6[%c0_11, %c0_12] : memref<1000x128xbf16, #tpu.memory_space<vmem>>, vector<1000x128xbf16>
    %cst_13 = arith.constant dense<0.000000e+00> : vector<16x128xf32>
    %15 = tpu.matmul %3, %14, %cst_13 {dimension_numbers = #tpu.dot_dimension_numbers<[1], [0], [0], [1], [0, 0, 1, 1], [], []>} : vector<16x1000xbf16>, vector<1000x128xbf16>, vector<16x128xf32> -> vector<16x128xf32>
    %16 = arith.addf %13, %15 : vector<16x128xf32>
    %c0_14 = arith.constant 0 : index
    %c0_15 = arith.constant 0 : index
    %17 = vector.load %arg7[%c0_14, %c0_15] : memref<1x128xf32, #tpu.memory_space<vmem>>, vector<1x128xf32>
    %18 = vector.broadcast %17 : vector<1x128xf32> to vector<16x128xf32>
    %19 = arith.addf %16, %18 : vector<16x128xf32>
    %20 = arith.truncf %19 : vector<16x128xf32> to vector<16x128xbf16>
    %c0_16 = arith.constant 0 : index
    %c0_17 = arith.constant 0 : index
    %21 = vector.load %arg8[%c0_16, %c0_17] : memref<16x128xbf16, #tpu.memory_space<vmem>>, vector<16x128xbf16>
    tpu.vector_store %arg8[%c0_16, %c0_17], %20 {strides = array<i32>} : memref<16x128xbf16, #tpu.memory_space<vmem>>, vector<16x128xbf16>,
    return
  }
  func.func @transform_0(%arg0: i32) -> (i32, i32) {
    %c0_i32 = arith.constant 0 : i32
    %c0_i32_0 = arith.constant 0 : i32
    return %arg0, %c0_i32 : i32, i32
  }
  func.func @transform_1(%arg0: i32) -> (i32, i32) {
    %c0_i32 = arith.constant 0 : i32
    %c0_i32_0 = arith.constant 0 : i32
    return %arg0, %c0_i32 : i32, i32
  }
  func.func @transform_2(%arg0: i32) -> (i32, i32) {
    %c0_i32 = arith.constant 0 : i32
    %c0_i32_0 = arith.constant 0 : i32
    %c0_i32_1 = arith.constant 0 : i32
    return %c0_i32, %c0_i32_0 : i32, i32
  }
  func.func @transform_3(%arg0: i32) -> (i32, i32) {
    %c0_i32 = arith.constant 0 : i32
    %c0_i32_0 = arith.constant 0 : i32
    %c0_i32_1 = arith.constant 0 : i32
    return %c0_i32, %c0_i32_0 : i32, i32
  }
  func.func @transform_4(%arg0: i32) -> (i32, i32) {
    %c0_i32 = arith.constant 0 : i32
    %c0_i32_0 = arith.constant 0 : i32
    %c0_i32_1 = arith.constant 0 : i32
    return %c0_i32, %c0_i32_0 : i32, i32
  }
  func.func @transform_5(%arg0: i32) -> (i32, i32) {
    %c0_i32 = arith.constant 0 : i32
    %c0_i32_0 = arith.constant 0 : i32
    %c0_i32_1 = arith.constant 0 : i32
    return %c0_i32, %c0_i32_0 : i32, i32
  }
  func.func @transform_6(%arg0: i32) -> (i32, i32) {
    %c0_i32 = arith.constant 0 : i32
    %c0_i32_0 = arith.constant 0 : i32
    %c0_i32_1 = arith.constant 0 : i32
    return %c0_i32, %c0_i32_0 : i32, i32
  }
  func.func @transform_7(%arg0: i32) -> (i32, i32) {
    %c0_i32 = arith.constant 0 : i32
    %c0_i32_0 = arith.constant 0 : i32
    return %arg0, %c0_i32 : i32, i32
  }
}

</mosaic_0001>

<llo_original>
// kernel: tpu_custom_call.1
$region0: #{tpu_custom_call.1}
  #allocation0 [shape = 'u32[]', space=smem, size = 0x4, offset = 0x4, fixed_abs, tag = 'smem constant byte address 0x4 - core index']
  #allocation1 [shape = 'u32[144,128]{1,0:T(1,128)}', space=vmem, size = 0x12000, scoped, tag = 'internal scratch']
  %s0 = inlined_call_operand.hbm [shape: f32[8,768], index: 0, kind: input, shape index: {}]
  %s1 = inlined_call_operand.hbm [shape: f32[8,1000], index: 1, kind: input, shape index: {}]
  %s2 = inlined_call_operand.hbm [shape: bf16[768,128], index: 2, kind: input, shape index: {}]
  %s3 = inlined_call_operand.vmem [shape: f32[1,128], index: 3, kind: input, shape index: {}]
  %s4 = inlined_call_operand.hbm [shape: bf16[128,128], index: 4, kind: input, shape index: {}]
  %s5 = inlined_call_operand.hbm [shape: bf16[1000,128], index: 5, kind: input, shape index: {}]
  %s6 = inlined_call_operand.vmem [shape: f32[1,128], index: 6, kind: input, shape index: {}]
  %s7 = inlined_call_operand.hbm [shape: bf16[8,128], index: 7, kind: output, shape index: {}]
  %s8 = sld [smem:[#allocation0]]
  $region58: #{tpu_custom_call.1} parent=0
    _
  %s10 = ssub.s32 1, %s8
  %s11 = scalar_select 0, %s10, %s8
  $region1: #{tpu_custom_call.1} parent=0
    #allocation2 [shape = 'u8[49152]{0}', space=vmem, size = 0xc000, scoped, tag = 'input window, operand 0, single buffered']
    #allocation3 [shape = 's32[1]{0}', space=sflag, size = 0x4, scoped, tag = 'scoped memory for tpu_custom_call.1']
    #allocation4 [shape = 's32[1]{0}', space=sflag, size = 0x4, scoped, tag = 'scoped memory for tpu_custom_call.1']
    #allocation5 [shape = 'u8[65536]{0}', space=vmem, size = 0x10000, scoped, tag = 'input window, operand 1, single buffered']
    #allocation6 [shape = 's32[1]{0}', space=sflag, size = 0x4, scoped, tag = 'scoped memory for tpu_custom_call.1']
    #allocation7 [shape = 'u8[196608]{0}', space=vmem, size = 0x30000, scoped, tag = 'input window, operand 2, single buffered']
    #allocation8 [shape = 'u8[32768]{0}', space=vmem, size = 0x8000, scoped, tag = 'input window, operand 4, single buffered']
    #allocation9 [shape = 's32[1]{0}', space=sflag, size = 0x4, scoped, tag = 'scoped memory for tpu_custom_call.1']
    #allocation10 [shape = 'u8[256000]{0}', space=vmem, size = 0x3e800, scoped, tag = 'input window, operand 5, single buffered']
    #allocation11 [shape = 'u8[4096]{0}', space=vmem, size = 0x1000, scoped, tag = 'output window, operand 0, single buffered']
    %12 = vsyncpa [#allocation3], 0
    %13 = vsyncpa [#allocation6], 0
    %14 = vsyncpa [#allocation9], 0
    %15 = vsyncpa [#allocation4], 0
    // Predicated region
    $region2: #{tpu_custom_call.1} parent=1 // pred_check
      _
    $region3: #{tpu_custom_call.1} parent=1 // pred_check_branch
      %17 = sbr.rel (0) target = $region5
    $region4: #{tpu_custom_call.1} parent=1 // pred_region
      %s19 = ssub.s32 1536, 768
      %20 = vsyncadd [#allocation3], %s19
      %s21 = sshll.u32 [#allocation2], 4
      %s22 = int_to_ptr.vmem [resolvable:$true] %s21
      %27 = dma.hbm_to_vmem [thread:$0]  %s0, 768, %s22, [#allocation3], 768, 768, 48
    $region5: #{tpu_custom_call.1} parent=1 // pred_fallthru
      _
    // Predicated region
    $region6: #{tpu_custom_call.1} parent=1 // pred_check
      _
    $region7: #{tpu_custom_call.1} parent=1 // pred_check_branch
      %29 = sbr.rel (0) target = $region9
    $region8: #{tpu_custom_call.1} parent=1 // pred_region
      %s31 = ssub.s32 2048, 1024
      %32 = vsyncadd [#allocation6], %s31
      %s33 = sshll.u32 [#allocation5], 4
      %s34 = int_to_ptr.vmem [resolvable:$true] %s33
      %39 = dma.hbm_to_vmem [thread:$0]  %s1, 1024, %s34, [#allocation6], 1024, 1024, 64
    $region9: #{tpu_custom_call.1} parent=1 // pred_fallthru
      _
    // Predicated region
    $region10: #{tpu_custom_call.1} parent=1 // pred_check
      _
    $region11: #{tpu_custom_call.1} parent=1 // pred_check_branch
      %41 = sbr.rel (0) target = $region13
    $region12: #{tpu_custom_call.1} parent=1 // pred_region
      %s43 = ssub.s32 6144, 6144
      %44 = vsyncadd [#allocation6], %s43
      %s45 = sshll.u32 [#allocation7], 4
      %s46 = int_to_ptr.vmem [resolvable:$true] %s45
      %51 = dma.hbm_to_vmem [thread:$0]  %s2, 6144, %s46, [#allocation6], 64, 64, 4
    $region13: #{tpu_custom_call.1} parent=1 // pred_fallthru
      _
    // Predicated region
    $region14: #{tpu_custom_call.1} parent=1 // pred_check
      _
    $region15: #{tpu_custom_call.1} parent=1 // pred_check_branch
      %53 = sbr.rel (0) target = $region17
    $region16: #{tpu_custom_call.1} parent=1 // pred_region
      _
    $region17: #{tpu_custom_call.1} parent=1 // pred_fallthru
      _
    // Predicated region
    $region18: #{tpu_custom_call.1} parent=1 // pred_check
      _
    $region19: #{tpu_custom_call.1} parent=1 // pred_check_branch
      %55 = sbr.rel (0) target = $region21
    $region20: #{tpu_custom_call.1} parent=1 // pred_region
      %s57 = ssub.s32 1024, 1024
      %58 = vsyncadd [#allocation9], %s57
      %s59 = sshll.u32 [#allocation8], 4
      %s60 = int_to_ptr.vmem [resolvable:$true] %s59
      %65 = dma.hbm_to_vmem [thread:$0]  %s4, 1024, %s60, [#allocation9], 64, 64, 4
    $region21: #{tpu_custom_call.1} parent=1 // pred_fallthru
      _
    // Predicated region
    $region22: #{tpu_custom_call.1} parent=1 // pred_check
      _
    $region23: #{tpu_custom_call.1} parent=1 // pred_check_branch
      %67 = sbr.rel (0) target = $region25
    $region24: #{tpu_custom_call.1} parent=1 // pred_region
      %s69 = ssub.s32 8000, 8000
      %70 = vsyncadd [#allocation9], %s69
      %s71 = sshll.u32 [#allocation10], 4
      %s72 = int_to_ptr.vmem [resolvable:$true] %s71
      %77 = dma.hbm_to_vmem [thread:$0]  %s5, 8000, %s72, [#allocation9], 64, 64, 4
    $region25: #{tpu_custom_call.1} parent=1 // pred_fallthru
      _
    // Predicated region
    $region26: #{tpu_custom_call.1} parent=1 // pred_check
      _
    $region27: #{tpu_custom_call.1} parent=1 // pred_check_branch
      %79 = sbr.rel (0) target = $region29
    $region28: #{tpu_custom_call.1} parent=1 // pred_region
      _
    $region29: #{tpu_custom_call.1} parent=1 // pred_fallthru
      _
    // Predicated region
    $region30: #{tpu_custom_call.1} parent=1 // pred_check
      _
    $region31: #{tpu_custom_call.1} parent=1 // pred_check_branch
      %81 = sbr.rel (0) target = $region33
    $region32: #{tpu_custom_call.1} parent=1 // pred_region
      %82 = dma.done [#allocation3], 1536
    $region33: #{tpu_custom_call.1} parent=1 // pred_fallthru
      _
    // Predicated region
    $region34: #{tpu_custom_call.1} parent=1 // pred_check
      _
    $region35: #{tpu_custom_call.1} parent=1 // pred_check_branch
      %84 = sbr.rel (0) target = $region37
    $region36: #{tpu_custom_call.1} parent=1 // pred_region
      %85 = dma.done [#allocation6], 2048
    $region37: #{tpu_custom_call.1} parent=1 // pred_fallthru
      _
    // Predicated region
    $region38: #{tpu_custom_call.1} parent=1 // pred_check
      _
    $region39: #{tpu_custom_call.1} parent=1 // pred_check_branch
      %87 = sbr.rel (0) target = $region41
    $region40: #{tpu_custom_call.1} parent=1 // pred_region
      %88 = dma.done [#allocation6], 6144
    $region41: #{tpu_custom_call.1} parent=1 // pred_fallthru
      _
    // Predicated region
    $region42: #{tpu_custom_call.1} parent=1 // pred_check
      _
    $region43: #{tpu_custom_call.1} parent=1 // pred_check_branch
      %90 = sbr.rel (0) target = $region45
    $region44: #{tpu_custom_call.1} parent=1 // pred_region
      %91 = dma.done [#allocation9], 1024
    $region45: #{tpu_custom_call.1} parent=1 // pred_fallthru
      _
    // Predicated region
    $region46: #{tpu_custom_call.1} parent=1 // pred_check
      _
    $region47: #{tpu_custom_call.1} parent=1 // pred_check_branch
      %93 = sbr.rel (0) target = $region49
    $region48: #{tpu_custom_call.1} parent=1 // pred_region
      %94 = dma.done [#allocation9], 8000
    $region49: #{tpu_custom_call.1} parent=1 // pred_fallthru
      _
    %v96 = vld [vmem:[#allocation2] sm:$0xff]
    %v97 = vld [vmem:[#allocation2 + $0x8] sm:$0xff]
    %v98 = vld [vmem:[#allocation2 + $0x10] sm:$0xff]
    %v99 = vld [vmem:[#allocation2 + $0x18] sm:$0xff]
    %v100 = vld [vmem:[#allocation2 + $0x20] sm:$0xff]
    %v101 = vld [vmem:[#allocation2 + $0x28] sm:$0xff]
    %v102 = vld [vmem:[#allocation2 + $0x30] sm:$0xff]
    %v103 = vld [vmem:[#allocation2 + $0x38] sm:$0xff]
    %v104 = vld [vmem:[#allocation2 + $0x40] sm:$0xff]
    %v105 = vld [vmem:[#allocation2 + $0x48] sm:$0xff]
    %v106 = vld [vmem:[#allocation2 + $0x50] sm:$0xff]
    %v107 = vld [vmem:[#allocation2 + $0x58] sm:$0xff]
    %v108 = vpack.c.bf16 %v102, %v96
    %v109 = vpack.c.bf16 %v103, %v97
    %v110 = vpack.c.bf16 %v104, %v98
    %v111 = vpack.c.bf16 %v105, %v99
    %v112 = vpack.c.bf16 %v106, %v100
    %v113 = vpack.c.bf16 %v107, %v101
    %v114 = vld [vmem:[#allocation5] sm:$0xff]
    %v115 = vld [vmem:[#allocation5 + $0x8] sm:$0xff]
    %v116 = vld [vmem:[#allocation5 + $0x10] sm:$0xff]
    %v117 = vld [vmem:[#allocation5 + $0x18] sm:$0xff]
    %v118 = vld [vmem:[#allocation5 + $0x20] sm:$0xff]
    %v119 = vld [vmem:[#allocation5 + $0x28] sm:$0xff]
    %v120 = vld [vmem:[#allocation5 + $0x30] sm:$0xff]
    %v121 = vld [vmem:[#allocation5 + $0x38] sm:$0xff]
    %v122 = vld [vmem:[#allocation5 + $0x40] sm:$0xff]
    %v123 = vld [vmem:[#allocation5 + $0x48] sm:$0xff]
    %v124 = vld [vmem:[#allocation5 + $0x50] sm:$0xff]
    %v125 = vld [vmem:[#allocation5 + $0x58] sm:$0xff]
    %v126 = vld [vmem:[#allocation5 + $0x60] sm:$0xff]
    %v127 = vld [vmem:[#allocation5 + $0x68] sm:$0xff]
    %v128 = vld [vmem:[#allocation5 + $0x70] sm:$0xff]
    %v129 = vld [vmem:[#allocation5 + $0x78] sm:$0xff]
    %v130 = vpack.c.bf16 %v122, %v114
    %v131 = vpack.c.bf16 %v123, %v115
    %v132 = vpack.c.bf16 %v124, %v116
    %v133 = vpack.c.bf16 %v125, %v117
    %v134 = vpack.c.bf16 %v126, %v118
    %v135 = vpack.c.bf16 %v127, %v119
    %v136 = vpack.c.bf16 %v128, %v120
    %v137 = vpack.c.bf16 %v129, %v121
    %v138 = vld [vmem:[#allocation7] sm:$0xf]
    %v139 = vld [vmem:[#allocation7 + $0x4] sm:$0xf]
    %v140 = vld [vmem:[#allocation7 + $0x8] sm:$0xf]
    %v141 = vld [vmem:[#allocation7 + $0xc] sm:$0xf]
    %v142 = vld [vmem:[#allocation7 + $0x10] sm:$0xf]
    %v143 = vld [vmem:[#allocation7 + $0x14] sm:$0xf]
    %v144 = vld [vmem:[#allocation7 + $0x18] sm:$0xf]
    %v145 = vld [vmem:[#allocation7 + $0x1c] sm:$0xf]
    %v146 = vld [vmem:[#allocation7 + $0x20] sm:$0xf]
    %v147 = vld [vmem:[#allocation7 + $0x24] sm:$0xf]
    %v148 = vld [vmem:[#allocation7 + $0x28] sm:$0xf]
    %v149 = vld [vmem:[#allocation7 + $0x2c] sm:$0xf]
    %v150 = vld [vmem:[#allocation7 + $0x30] sm:$0xf]
    %v151 = vld [vmem:[#allocation7 + $0x34] sm:$0xf]
    %v152 = vld [vmem:[#allocation7 + $0x38] sm:$0xf]
    %v153 = vld [vmem:[#allocation7 + $0x3c] sm:$0xf]
    %v154 = vld [vmem:[#allocation7 + $0x40] sm:$0xf]
    %v155 = vld [vmem:[#allocation7 + $0x44] sm:$0xf]
    %v156 = vld [vmem:[#allocation7 + $0x48] sm:$0xf]
    %v157 = vld [vmem:[#allocation7 + $0x4c] sm:$0xf]
    %v158 = vld [vmem:[#allocation7 + $0x50] sm:$0xf]
    %v159 = vld [vmem:[#allocation7 + $0x54] sm:$0xf]
    %v160 = vld [vmem:[#allocation7 + $0x58] sm:$0xf]
    %v161 = vld [vmem:[#allocation7 + $0x5c] sm:$0xf]
    %v162 = vld [vmem:[#allocation7 + $0x60] sm:$0xf]
    %v163 = vld [vmem:[#allocation7 + $0x64] sm:$0xf]
    %v164 = vld [vmem:[#allocation7 + $0x68] sm:$0xf]
    %v165 = vld [vmem:[#allocation7 + $0x6c] sm:$0xf]
    %v166 = vld [vmem:[#allocation7 + $0x70] sm:$0xf]
    %v167 = vld [vmem:[#allocation7 + $0x74] sm:$0xf]
    %v168 = vld [vmem:[#allocation7 + $0x78] sm:$0xf]
    %v169 = vld [vmem:[#allocation7 + $0x7c] sm:$0xf]
    %v170 = vld [vmem:[#allocation7 + $0x80] sm:$0xf]
    %v171 = vld [vmem:[#allocation7 + $0x84] sm:$0xf]
    %v172 = vld [vmem:[#allocation7 + $0x88] sm:$0xf]
    %v173 = vld [vmem:[#allocation7 + $0x8c] sm:$0xf]
    %v174 = vld [vmem:[#allocation7 + $0x90] sm:$0xf]
    %v175 = vld [vmem:[#allocation7 + $0x94] sm:$0xf]
    %v176 = vld [vmem:[#allocation7 + $0x98] sm:$0xf]
    %v177 = vld [vmem:[#allocation7 + $0x9c] sm:$0xf]
    %v178 = vld [vmem:[#allocation7 + $0xa0] sm:$0xf]
    %v179 = vld [vmem:[#allocation7 + $0xa4] sm:$0xf]
    %v180 = vld [vmem:[#allocation7 + $0xa8] sm:$0xf]
    %v181 = vld [vmem:[#allocation7 + $0xac] sm:$0xf]
    %v182 = vld [vmem:[#allocation7 + $0xb0] sm:$0xf]
    %v183 = vld [vmem:[#allocation7 + $0xb4] sm:$0xf]
    %v184 = vld [vmem:[#allocation7 + $0xb8] sm:$0xf]
    %v185 = vld [vmem:[#allocation7 + $0xbc] sm:$0xf]
    %v186 = vld [vmem:[#allocation7 + $0xc0] sm:$0xf]
    %v187 = vld [vmem:[#allocation7 + $0xc4] sm:$0xf]
    %v188 = vld [vmem:[#allocation7 + $0xc8] sm:$0xf]
    %v189 = vld [vmem:[#allocation7 + $0xcc] sm:$0xf]
    %v190 = vld [vmem:[#allocation7 + $0xd0] sm:$0xf]
    %v191 = vld [vmem:[#allocation7 + $0xd4] sm:$0xf]
    %v192 = vld [vmem:[#allocation7 + $0xd8] sm:$0xf]
    %v193 = vld [vmem:[#allocation7 + $0xdc] sm:$0xf]
    %v194 = vld [vmem:[#allocation7 + $0xe0] sm:$0xf]
    %v195 = vld [vmem:[#allocation7 + $0xe4] sm:$0xf]
    %v196 = vld [vmem:[#allocation7 + $0xe8] sm:$0xf]
    %v197 = vld [vmem:[#allocation7 + $0xec] sm:$0xf]
    %v198 = vld [vmem:[#allocation7 + $0xf0] sm:$0xf]
    %v199 = vld [vmem:[#allocation7 + $0xf4] sm:$0xf]
    %v200 = vld [vmem:[#allocation7 + $0xf8] sm:$0xf]
    %v201 = vld [vmem:[#allocation7 + $0xfc] sm:$0xf]
    %v202 = vld [vmem:[#allocation7 + $0x100] sm:$0xf]
    %v203 = vld [vmem:[#allocation7 + $0x104] sm:$0xf]
    %v204 = vld [vmem:[#allocation7 + $0x108] sm:$0xf]
    %v205 = vld [vmem:[#allocation7 + $0x10c] sm:$0xf]
    %v206 = vld [vmem:[#allocation7 + $0x110] sm:$0xf]
    %v207 = vld [vmem:[#allocation7 + $0x114] sm:$0xf]
    %v208 = vld [vmem:[#allocation7 + $0x118] sm:$0xf]
    %v209 = vld [vmem:[#allocation7 + $0x11c] sm:$0xf]
    %v210 = vld [vmem:[#allocation7 + $0x120] sm:$0xf]
    %v211 = vld [vmem:[#allocation7 + $0x124] sm:$0xf]
    %v212 = vld [vmem:[#allocation7 + $0x128] sm:$0xf]
    %v213 = vld [vmem:[#allocation7 + $0x12c] sm:$0xf]
    %v214 = vld [vmem:[#allocation7 + $0x130] sm:$0xf]
    %v215 = vld [vmem:[#allocation7 + $0x134] sm:$0xf]
    %v216 = vld [vmem:[#allocation7 + $0x138] sm:$0xf]
    %v217 = vld [vmem:[#allocation7 + $0x13c] sm:$0xf]
    %v218 = vld [vmem:[#allocation7 + $0x140] sm:$0xf]
    %v219 = vld [vmem:[#allocation7 + $0x144] sm:$0xf]
    %v220 = vld [vmem:[#allocation7 + $0x148] sm:$0xf]
    %v221 = vld [vmem:[#allocation7 + $0x14c] sm:$0xf]
    %v222 = vld [vmem:[#allocation7 + $0x150] sm:$0xf]
    %v223 = vld [vmem:[#allocation7 + $0x154] sm:$0xf]
    %v224 = vld [vmem:[#allocation7 + $0x158] sm:$0xf]
    %v225 = vld [vmem:[#allocation7 + $0x15c] sm:$0xf]
    %v226 = vld [vmem:[#allocation7 + $0x160] sm:$0xf]
    %v227 = vld [vmem:[#allocation7 + $0x164] sm:$0xf]
    %v228 = vld [vmem:[#allocation7 + $0x168] sm:$0xf]
    %v229 = vld [vmem:[#allocation7 + $0x16c] sm:$0xf]
    %v230 = vld [vmem:[#allocation7 + $0x170] sm:$0xf]
    %v231 = vld [vmem:[#allocation7 + $0x174] sm:$0xf]
    %v232 = vld [vmem:[#allocation7 + $0x178] sm:$0xf]
    %v233 = vld [vmem:[#allocation7 + $0x17c] sm:$0xf]
    %v234 = vld [vmem:[%s3] sm:$0x1]
    %v236 = vlaneseq
    %v237 = vshrl.u32 %v236, 7
    %v238 = vsub.s32 0, %v237
    %v239 = vrot.slane %v234, %v238
    %v337 = vunpack.c.l.b16 %v138
    %v338 = vunpack.c.l.b16 %v139
    %v339 = vunpack.c.l.b16 %v140
    %v340 = vunpack.c.l.b16 %v141
    %v341 = vunpack.c.l.b16 %v142
    %v342 = vunpack.c.l.b16 %v143
    %v343 = vunpack.c.l.b16 %v144
    %v344 = vunpack.c.l.b16 %v145
    %v345 = vunpack.c.l.b16 %v146
    %v346 = vunpack.c.l.b16 %v147
    %v347 = vunpack.c.l.b16 %v148
    %v348 = vunpack.c.l.b16 %v149
    %v349 = vunpack.c.l.b16 %v150
    %v350 = vunpack.c.l.b16 %v151
    %v351 = vunpack.c.l.b16 %v152
    %v352 = vunpack.c.l.b16 %v153
    %v353 = vunpack.c.l.b16 %v154
    %v354 = vunpack.c.l.b16 %v155
    %v355 = vunpack.c.l.b16 %v156
    %v356 = vunpack.c.l.b16 %v157
    %v357 = vunpack.c.l.b16 %v158
    %v358 = vunpack.c.l.b16 %v159
    %v359 = vunpack.c.l.b16 %v160
    %v360 = vunpack.c.l.b16 %v161
    %v361 = vunpack.c.l.b16 %v162
    %v362 = vunpack.c.l.b16 %v163
    %v363 = vunpack.c.l.b16 %v164
    %v364 = vunpack.c.l.b16 %v165
    %v365 = vunpack.c.l.b16 %v166
    %v366 = vunpack.c.l.b16 %v167
    %v367 = vunpack.c.l.b16 %v168
    %v368 = vunpack.c.l.b16 %v169
    %v369 = vunpack.c.l.b16 %v170
    %v370 = vunpack.c.l.b16 %v171
    %v371 = vunpack.c.l.b16 %v172
    %v372 = vunpack.c.l.b16 %v173
    %v373 = vunpack.c.l.b16 %v174
    %v374 = vunpack.c.l.b16 %v175
    %v375 = vunpack.c.l.b16 %v176
    %v376 = vunpack.c.l.b16 %v177
    %v377 = vunpack.c.l.b16 %v178
    %v378 = vunpack.c.l.b16 %v179
    %v379 = vunpack.c.l.b16 %v180
    %v380 = vunpack.c.l.b16 %v181
    %v381 = vunpack.c.l.b16 %v182
    %v382 = vunpack.c.l.b16 %v183
    %v383 = vunpack.c.l.b16 %v184
    %v384 = vunpack.c.l.b16 %v185
    %v385 = vunpack.c.l.b16 %v186
    %v386 = vunpack.c.l.b16 %v187
    %v387 = vunpack.c.l.b16 %v188
    %v388 = vunpack.c.l.b16 %v189
    %v389 = vunpack.c.l.b16 %v190
    %v390 = vunpack.c.l.b16 %v191
    %v391 = vunpack.c.l.b16 %v192
    %v392 = vunpack.c.l.b16 %v193
    %v393 = vunpack.c.l.b16 %v194
    %v394 = vunpack.c.l.b16 %v195
    %v395 = vunpack.c.l.b16 %v196
    %v396 = vunpack.c.l.b16 %v197
    %v397 = vunpack.c.l.b16 %v198
    %v398 = vunpack.c.l.b16 %v199
    %v399 = vunpack.c.l.b16 %v200
    %v400 = vunpack.c.l.b16 %v201
    %v401 = vunpack.c.l.b16 %v202
    %v402 = vunpack.c.l.b16 %v203
    %v403 = vunpack.c.l.b16 %v204
    %v404 = vunpack.c.l.b16 %v205
    %v405 = vunpack.c.l.b16 %v206
    %v406 = vunpack.c.l.b16 %v207
    %v407 = vunpack.c.l.b16 %v208
    %v408 = vunpack.c.l.b16 %v209
    %v409 = vunpack.c.l.b16 %v210
    %v410 = vunpack.c.l.b16 %v211
    %v411 = vunpack.c.l.b16 %v212
    %v412 = vunpack.c.l.b16 %v213
    %v413 = vunpack.c.l.b16 %v214
    %v414 = vunpack.c.l.b16 %v215
    %v415 = vunpack.c.l.b16 %v216
    %v416 = vunpack.c.l.b16 %v217
    %v417 = vunpack.c.l.b16 %v218
    %v418 = vunpack.c.l.b16 %v219
    %v419 = vunpack.c.l.b16 %v220
    %v420 = vunpack.c.l.b16 %v221
    %v421 = vunpack.c.l.b16 %v222
    %v422 = vunpack.c.l.b16 %v223
    %v423 = vunpack.c.l.b16 %v224
    %v424 = vunpack.c.l.b16 %v225
    %v425 = vunpack.c.l.b16 %v226
    %v426 = vunpack.c.l.b16 %v227
    %v427 = vunpack.c.l.b16 %v228
    %v428 = vunpack.c.l.b16 %v229
    %v429 = vunpack.c.l.b16 %v230
    %v430 = vunpack.c.l.b16 %v231
    %v431 = vunpack.c.l.b16 %v232
    %v432 = vunpack.c.l.b16 %v233
    %v433 = vpack.c.b16 %v338, %v337
    %v434 = vpack.c.b16 %v340, %v339
    %v435 = vpack.c.b16 %v342, %v341
    %v436 = vpack.c.b16 %v344, %v343
    %v437 = vpack.c.b16 %v346, %v345
    %v438 = vpack.c.b16 %v348, %v347
    %v439 = vpack.c.b16 %v350, %v349
    %v440 = vpack.c.b16 %v352, %v351
    %v441 = vpack.c.b16 %v354, %v353
    %v442 = vpack.c.b16 %v356, %v355
    %v443 = vpack.c.b16 %v358, %v357
    %v444 = vpack.c.b16 %v360, %v359
    %v445 = vpack.c.b16 %v362, %v361
    %v446 = vpack.c.b16 %v364, %v363
    %v447 = vpack.c.b16 %v366, %v365
    %v448 = vpack.c.b16 %v368, %v367
    %v449 = vpack.c.b16 %v370, %v369
    %v450 = vpack.c.b16 %v372, %v371
    %v451 = vpack.c.b16 %v374, %v373
    %v452 = vpack.c.b16 %v376, %v375
    %v453 = vpack.c.b16 %v378, %v377
    %v454 = vpack.c.b16 %v380, %v379
    %v455 = vpack.c.b16 %v382, %v381
    %v456 = vpack.c.b16 %v384, %v383
    %v457 = vpack.c.b16 %v386, %v385
    %v458 = vpack.c.b16 %v388, %v387
    %v459 = vpack.c.b16 %v390, %v389
    %v460 = vpack.c.b16 %v392, %v391
    %v461 = vpack.c.b16 %v394, %v393
    %v462 = vpack.c.b16 %v396, %v395
    %v463 = vpack.c.b16 %v398, %v397
    %v464 = vpack.c.b16 %v400, %v399
    %v465 = vpack.c.b16 %v402, %v401
    %v466 = vpack.c.b16 %v404, %v403
    %v467 = vpack.c.b16 %v406, %v405
    %v468 = vpack.c.b16 %v408, %v407
    %v469 = vpack.c.b16 %v410, %v409
    %v470 = vpack.c.b16 %v412, %v411
    %v471 = vpack.c.b16 %v414, %v413
    %v472 = vpack.c.b16 %v416, %v415
    %v473 = vpack.c.b16 %v418, %v417
    %v474 = vpack.c.b16 %v420, %v419
    %v475 = vpack.c.b16 %v422, %v421
    %v476 = vpack.c.b16 %v424, %v423
    %v477 = vpack.c.b16 %v426, %v425
    %v478 = vpack.c.b16 %v428, %v427
    %v479 = vpack.c.b16 %v430, %v429
    %v480 = vpack.c.b16 %v432, %v431
    %529 = vmatprep.subr.bf16.mxu0 0
    %530 = vmatpush1.bf16.msra.mxu0 %v440
    %531 = vmatprep.subr.bf16.mxu0 0
    %532 = vmatpush1.bf16.msra.mxu0 %v439
    %533 = vmatprep.subr.bf16.mxu0 0
    %534 = vmatpush1.bf16.msra.mxu0 %v438
    %535 = vmatprep.subr.bf16.mxu0 0
    %536 = vmatpush1.bf16.msra.mxu0 %v437
    %537 = vmatprep.subr.bf16.mxu0 0
    %538 = vmatpush1.bf16.msra.mxu0 %v436
    %539 = vmatprep.subr.bf16.mxu0 0
    %540 = vmatpush1.bf16.msra.mxu0 %v435
    %541 = vmatprep.subr.bf16.mxu0 0
    %542 = vmatpush1.bf16.msra.mxu0 %v434
    %543 = vmatprep.subr.bf16.mxu0 0
    %544 = vmatpush1.bf16.msra.mxu0 %v433
    %545 = vmatprep.subr.bf16.mxu0 0
    %546 = vmatpush2.bf16.msra.mxu0 %v448
    %547 = vmatprep.subr.bf16.mxu0 0
    %548 = vmatpush2.bf16.msra.mxu0 %v447
    %549 = vmatprep.subr.bf16.mxu0 0
    %550 = vmatpush2.bf16.msra.mxu0 %v446
    %551 = vmatprep.subr.bf16.mxu0 0
    %552 = vmatpush2.bf16.msra.mxu0 %v445
    %553 = vmatprep.subr.bf16.mxu0 0
    %554 = vmatpush2.bf16.msra.mxu0 %v444
    %555 = vmatprep.subr.bf16.mxu0 0
    %556 = vmatpush2.bf16.msra.mxu0 %v443
    %557 = vmatprep.subr.bf16.mxu0 0
    %558 = vmatpush2.bf16.msra.mxu0 %v442
    %559 = vmatprep.subr.bf16.mxu0 0
    %560 = vmatpush2.bf16.msra.mxu0 %v441
    %561 = vmatprep.mubr.bf16.mxu0 %v109
    %562 = vmatmul.mubr.bf16.gmra.mxu0 %v108
    %v563 = vpop.f32.mrf.mxu0
    %v564 = vadd.f32 %v239, %v563
    %v565 = vpop.f32.mrf.mxu0
    %v566 = vpop.f32.mrf.mxu0
    %v567 = vadd.f32 %v239, %v566
    %v568 = vpop.f32.mrf.mxu0
    %569 = vdwg.mxu0
    %570 = vmatprep.subr.bf16.mxu0 0
    %571 = vmatpush1.bf16.msra.mxu0 %v456
    %572 = vmatprep.subr.bf16.mxu0 0
    %573 = vmatpush1.bf16.msra.mxu0 %v455
    %574 = vmatprep.subr.bf16.mxu0 0
    %575 = vmatpush1.bf16.msra.mxu0 %v454
    %576 = vmatprep.subr.bf16.mxu0 0
    %577 = vmatpush1.bf16.msra.mxu0 %v453
    %578 = vmatprep.subr.bf16.mxu0 0
    %579 = vmatpush1.bf16.msra.mxu0 %v452
    %580 = vmatprep.subr.bf16.mxu0 0
    %581 = vmatpush1.bf16.msra.mxu0 %v451
    %582 = vmatprep.subr.bf16.mxu0 0
    %583 = vmatpush1.bf16.msra.mxu0 %v450
    %584 = vmatprep.subr.bf16.mxu0 0
    %585 = vmatpush1.bf16.msra.mxu0 %v449
    %586 = vmatprep.subr.bf16.mxu0 0
    %587 = vmatpush2.bf16.msra.mxu0 %v464
    %588 = vmatprep.subr.bf16.mxu0 0
    %589 = vmatpush2.bf16.msra.mxu0 %v463
    %590 = vmatprep.subr.bf16.mxu0 0
    %591 = vmatpush2.bf16.msra.mxu0 %v462
    %592 = vmatprep.subr.bf16.mxu0 0
    %593 = vmatpush2.bf16.msra.mxu0 %v461
    %594 = vmatprep.subr.bf16.mxu0 0
    %595 = vmatpush2.bf16.msra.mxu0 %v460
    %596 = vmatprep.subr.bf16.mxu0 0
    %597 = vmatpush2.bf16.msra.mxu0 %v459
    %598 = vmatprep.subr.bf16.mxu0 0
    %599 = vmatpush2.bf16.msra.mxu0 %v458
    %600 = vmatprep.subr.bf16.mxu0 0
    %601 = vmatpush2.bf16.msra.mxu0 %v457
    %602 = vmatprep.mubr.bf16.mxu0 %v111
    %603 = vmatmul.mubr.bf16.gmra.mxu0 %v110
    %v604 = vpop.f32.mrf.mxu0
    %v605 = vadd.f32 %v564, %v604
    %v606 = vpop.f32.mrf.mxu0
    %v607 = vpop.f32.mrf.mxu0
    %v608 = vadd.f32 %v567, %v607
    %v609 = vpop.f32.mrf.mxu0
    %610 = vdwg.mxu0
    %611 = vmatprep.subr.bf16.mxu0 0
    %612 = vmatpush1.bf16.msra.mxu0 %v472
    %613 = vmatprep.subr.bf16.mxu0 0
    %614 = vmatpush1.bf16.msra.mxu0 %v471
    %615 = vmatprep.subr.bf16.mxu0 0
    %616 = vmatpush1.bf16.msra.mxu0 %v470
    %617 = vmatprep.subr.bf16.mxu0 0
    %618 = vmatpush1.bf16.msra.mxu0 %v469
    %619 = vmatprep.subr.bf16.mxu0 0
    %620 = vmatpush1.bf16.msra.mxu0 %v468
    %621 = vmatprep.subr.bf16.mxu0 0
    %622 = vmatpush1.bf16.msra.mxu0 %v467
    %623 = vmatprep.subr.bf16.mxu0 0
    %624 = vmatpush1.bf16.msra.mxu0 %v466
    %625 = vmatprep.subr.bf16.mxu0 0
    %626 = vmatpush1.bf16.msra.mxu0 %v465
    %627 = vmatprep.subr.bf16.mxu0 0
    %628 = vmatpush2.bf16.msra.mxu0 %v480
    %629 = vmatprep.subr.bf16.mxu0 0
    %630 = vmatpush2.bf16.msra.mxu0 %v479
    %631 = vmatprep.subr.bf16.mxu0 0
    %632 = vmatpush2.bf16.msra.mxu0 %v478
    %633 = vmatprep.subr.bf16.mxu0 0
    %634 = vmatpush2.bf16.msra.mxu0 %v477
    %635 = vmatprep.subr.bf16.mxu0 0
    %636 = vmatpush2.bf16.msra.mxu0 %v476
    %637 = vmatprep.subr.bf16.mxu0 0
    %638 = vmatpush2.bf16.msra.mxu0 %v475
    %639 = vmatprep.subr.bf16.mxu0 0
    %640 = vmatpush2.bf16.msra.mxu0 %v474
    %641 = vmatprep.subr.bf16.mxu0 0
    %642 = vmatpush2.bf16.msra.mxu0 %v473
    %643 = vmatprep.mubr.bf16.mxu0 %v113
    %644 = vmatmul.mubr.bf16.gmra.mxu0 %v112
    %v645 = vpop.f32.mrf.mxu0
    %v646 = vadd.f32 %v605, %v645
    %v647 = vpop.f32.mrf.mxu0
    %v648 = vpop.f32.mrf.mxu0
    %v649 = vadd.f32 %v608, %v648
    %v650 = vpop.f32.mrf.mxu0
    %651 = vdwg.mxu0
    %v652 = vmax.f32 %v646, 0.0
    %v653 = vmax.f32 %v649, 0.0
    %v654 = vpack.c.bf16 %v653, %v652
    %v655 = vld [vmem:[#allocation8] sm:$0xf]
    %v656 = vld [vmem:[#allocation8 + $0x4] sm:$0xf]
    %v657 = vld [vmem:[#allocation8 + $0x8] sm:$0xf]
    %v658 = vld [vmem:[#allocation8 + $0xc] sm:$0xf]
    %v659 = vld [vmem:[#allocation8 + $0x10] sm:$0xf]
    %v660 = vld [vmem:[#allocation8 + $0x14] sm:$0xf]
    %v661 = vld [vmem:[#allocation8 + $0x18] sm:$0xf]
    %v662 = vld [vmem:[#allocation8 + $0x1c] sm:$0xf]
    %v663 = vld [vmem:[#allocation8 + $0x20] sm:$0xf]
    %v664 = vld [vmem:[#allocation8 + $0x24] sm:$0xf]
    %v665 = vld [vmem:[#allocation8 + $0x28] sm:$0xf]
    %v666 = vld [vmem:[#allocation8 + $0x2c] sm:$0xf]
    %v667 = vld [vmem:[#allocation8 + $0x30] sm:$0xf]
    %v668 = vld [vmem:[#allocation8 + $0x34] sm:$0xf]
    %v669 = vld [vmem:[#allocation8 + $0x38] sm:$0xf]
    %v670 = vld [vmem:[#allocation8 + $0x3c] sm:$0xf]
    %v671 = vld [vmem:[#allocation10] sm:$0xf]
    %v672 = vld [vmem:[#allocation10 + $0x4] sm:$0xf]
    %v673 = vld [vmem:[#allocation10 + $0x8] sm:$0xf]
    %v674 = vld [vmem:[#allocation10 + $0xc] sm:$0xf]
    %v675 = vld [vmem:[#allocation10 + $0x10] sm:$0xf]
    %v676 = vld [vmem:[#allocation10 + $0x14] sm:$0xf]
    %v677 = vld [vmem:[#allocation10 + $0x18] sm:$0xf]
    %v678 = vld [vmem:[#allocation10 + $0x1c] sm:$0xf]
    %v679 = vld [vmem:[#allocation10 + $0x20] sm:$0xf]
    %v680 = vld [vmem:[#allocation10 + $0x24] sm:$0xf]
    %v681 = vld [vmem:[#allocation10 + $0x28] sm:$0xf]
    %v682 = vld [vmem:[#allocation10 + $0x2c] sm:$0xf]
    %v683 = vld [vmem:[#allocation10 + $0x30] sm:$0xf]
    %v684 = vld [vmem:[#allocation10 + $0x34] sm:$0xf]
    %v685 = vld [vmem:[#allocation10 + $0x38] sm:$0xf]
    %v686 = vld [vmem:[#allocation10 + $0x3c] sm:$0xf]
    %v687 = vld [vmem:[#allocation10 + $0x40] sm:$0xf]
    %v688 = vld [vmem:[#allocation10 + $0x44] sm:$0xf]
    %v689 = vld [vmem:[#allocation10 + $0x48] sm:$0xf]
    %v690 = vld [vmem:[#allocation10 + $0x4c] sm:$0xf]
    %v691 = vld [vmem:[#allocation10 + $0x50] sm:$0xf]
    %v692 = vld [vmem:[#allocation10 + $0x54] sm:$0xf]
    %v693 = vld [vmem:[#allocation10 + $0x58] sm:$0xf]
    %v694 = vld [vmem:[#allocation10 + $0x5c] sm:$0xf]
    %v695 = vld [vmem:[#allocation10 + $0x60] sm:$0xf]
    %v696 = vld [vmem:[#allocation10 + $0x64] sm:$0xf]
    %v697 = vld [vmem:[#allocation10 + $0x68] sm:$0xf]
    %v698 = vld [vmem:[#allocation10 + $0x6c] sm:$0xf]
    %v699 = vld [vmem:[#allocation10 + $0x70] sm:$0xf]
    %v700 = vld [vmem:[#allocation10 + $0x74] sm:$0xf]
    %v701 = vld [vmem:[#allocation10 + $0x78] sm:$0xf]
    %v702 = vld [vmem:[#allocation10 + $0x7c] sm:$0xf]
    %v703 = vld [vmem:[#allocation10 + $0x80] sm:$0xf]
    %v704 = vld [vmem:[#allocation10 + $0x84] sm:$0xf]
    %v705 = vld [vmem:[#allocation10 + $0x88] sm:$0xf]
    %v706 = vld [vmem:[#allocation10 + $0x8c] sm:$0xf]
    %v707 = vld [vmem:[#allocation10 + $0x90] sm:$0xf]
    %v708 = vld [vmem:[#allocation10 + $0x94] sm:$0xf]
    %v709 = vld [vmem:[#allocation10 + $0x98] sm:$0xf]
    %v710 = vld [vmem:[#allocation10 + $0x9c] sm:$0xf]
    %v711 = vld [vmem:[#allocation10 + $0xa0] sm:$0xf]
    %v712 = vld [vmem:[#allocation10 + $0xa4] sm:$0xf]
    %v713 = vld [vmem:[#allocation10 + $0xa8] sm:$0xf]
    %v714 = vld [vmem:[#allocation10 + $0xac] sm:$0xf]
    %v715 = vld [vmem:[#allocation10 + $0xb0] sm:$0xf]
    %v716 = vld [vmem:[#allocation10 + $0xb4] sm:$0xf]
    %v717 = vld [vmem:[#allocation10 + $0xb8] sm:$0xf]
    %v718 = vld [vmem:[#allocation10 + $0xbc] sm:$0xf]
    %v719 = vld [vmem:[#allocation10 + $0xc0] sm:$0xf]
    %v720 = vld [vmem:[#allocation10 + $0xc4] sm:$0xf]
    %v721 = vld [vmem:[#allocation10 + $0xc8] sm:$0xf]
    %v722 = vld [vmem:[#allocation10 + $0xcc] sm:$0xf]
    %v723 = vld [vmem:[#allocation10 + $0xd0] sm:$0xf]
    %v724 = vld [vmem:[#allocation10 + $0xd4] sm:$0xf]
    %v725 = vld [vmem:[#allocation10 + $0xd8] sm:$0xf]
    %v726 = vld [vmem:[#allocation10 + $0xdc] sm:$0xf]
    %v727 = vld [vmem:[#allocation10 + $0xe0] sm:$0xf]
    %v728 = vld [vmem:[#allocation10 + $0xe4] sm:$0xf]
    %v729 = vld [vmem:[#allocation10 + $0xe8] sm:$0xf]
    %v730 = vld [vmem:[#allocation10 + $0xec] sm:$0xf]
    %v731 = vld [vmem:[#allocation10 + $0xf0] sm:$0xf]
    %v732 = vld [vmem:[#allocation10 + $0xf4] sm:$0xf]
    %v733 = vld [vmem:[#allocation10 + $0xf8] sm:$0xf]
    %v734 = vld [vmem:[#allocation10 + $0xfc] sm:$0xf]
    %v735 = vld [vmem:[#allocation10 + $0x100] sm:$0xf]
    %v736 = vld [vmem:[#allocation10 + $0x104] sm:$0xf]
    %v737 = vld [vmem:[#allocation10 + $0x108] sm:$0xf]
    %v738 = vld [vmem:[#allocation10 + $0x10c] sm:$0xf]
    %v739 = vld [vmem:[#allocation10 + $0x110] sm:$0xf]
    %v740 = vld [vmem:[#allocation10 + $0x114] sm:$0xf]
    %v741 = vld [vmem:[#allocation10 + $0x118] sm:$0xf]
    %v742 = vld [vmem:[#allocation10 + $0x11c] sm:$0xf]
    %v743 = vld [vmem:[#allocation10 + $0x120] sm:$0xf]
    %v744 = vld [vmem:[#allocation10 + $0x124] sm:$0xf]
    %v745 = vld [vmem:[#allocation10 + $0x128] sm:$0xf]
    %v746 = vld [vmem:[#allocation10 + $0x12c] sm:$0xf]
    %v747 = vld [vmem:[#allocation10 + $0x130] sm:$0xf]
    %v748 = vld [vmem:[#allocation10 + $0x134] sm:$0xf]
    %v749 = vld [vmem:[#allocation10 + $0x138] sm:$0xf]
    %v750 = vld [vmem:[#allocation10 + $0x13c] sm:$0xf]
    %v751 = vld [vmem:[#allocation10 + $0x140] sm:$0xf]
    %v752 = vld [vmem:[#allocation10 + $0x144] sm:$0xf]
    %v753 = vld [vmem:[#allocation10 + $0x148] sm:$0xf]
    %v754 = vld [vmem:[#allocation10 + $0x14c] sm:$0xf]
    %v755 = vld [vmem:[#allocation10 + $0x150] sm:$0xf]
    %v756 = vld [vmem:[#allocation10 + $0x154] sm:$0xf]
    %v757 = vld [vmem:[#allocation10 + $0x158] sm:$0xf]
    %v758 = vld [vmem:[#allocation10 + $0x15c] sm:$0xf]
    %v759 = vld [vmem:[#allocation10 + $0x160] sm:$0xf]
    %v760 = vld [vmem:[#allocation10 + $0x164] sm:$0xf]
    %v761 = vld [vmem:[#allocation10 + $0x168] sm:$0xf]
    %v762 = vld [vmem:[#allocation10 + $0x16c] sm:$0xf]
    %v763 = vld [vmem:[#allocation10 + $0x170] sm:$0xf]
    %v764 = vld [vmem:[#allocation10 + $0x174] sm:$0xf]
    %v765 = vld [vmem:[#allocation10 + $0x178] sm:$0xf]
    %v766 = vld [vmem:[#allocation10 + $0x17c] sm:$0xf]
    %v767 = vld [vmem:[#allocation10 + $0x180] sm:$0xf]
    %v768 = vld [vmem:[#allocation10 + $0x184] sm:$0xf]
    %v769 = vld [vmem:[#allocation10 + $0x188] sm:$0xf]
    %v770 = vld [vmem:[#allocation10 + $0x18c] sm:$0xf]
    %v771 = vld [vmem:[#allocation10 + $0x190] sm:$0xf]
    %v772 = vld [vmem:[#allocation10 + $0x194] sm:$0xf]
    %v773 = vld [vmem:[#allocation10 + $0x198] sm:$0xf]
    %v774 = vld [vmem:[#allocation10 + $0x19c] sm:$0xf]
    %v775 = vld [vmem:[#allocation10 + $0x1a0] sm:$0xf]
    %v776 = vld [vmem:[#allocation10 + $0x1a4] sm:$0xf]
    %v777 = vld [vmem:[#allocation10 + $0x1a8] sm:$0xf]
    %v778 = vld [vmem:[#allocation10 + $0x1ac] sm:$0xf]
    %v779 = vld [vmem:[#allocation10 + $0x1b0] sm:$0xf]
    %v780 = vld [vmem:[#allocation10 + $0x1b4] sm:$0xf]
    %v781 = vld [vmem:[#allocation10 + $0x1b8] sm:$0xf]
    %v782 = vld [vmem:[#allocation10 + $0x1bc] sm:$0xf]
    %v783 = vld [vmem:[#allocation10 + $0x1c0] sm:$0xf]
    %v784 = vld [vmem:[#allocation10 + $0x1c4] sm:$0xf]
    %v785 = vld [vmem:[#allocation10 + $0x1c8] sm:$0xf]
    %v786 = vld [vmem:[#allocation10 + $0x1cc] sm:$0xf]
    %v787 = vld [vmem:[#allocation10 + $0x1d0] sm:$0xf]
    %v788 = vld [vmem:[#allocation10 + $0x1d4] sm:$0xf]
    %v789 = vld [vmem:[#allocation10 + $0x1d8] sm:$0xf]
    %v790 = vld [vmem:[#allocation10 + $0x1dc] sm:$0xf]
    %v791 = vld [vmem:[#allocation10 + $0x1e0] sm:$0xf]
    %v792 = vld [vmem:[#allocation10 + $0x1e4] sm:$0xf]
    %v793 = vld [vmem:[#allocation10 + $0x1e8] sm:$0xf]
    %v794 = vld [vmem:[#allocation10 + $0x1ec] sm:$0xf]
    %v795 = vld [vmem:[#allocation10 + $0x1f0] sm:$0xf]
    %v921 = vunpack.c.l.b16 %v671
    %v922 = vunpack.c.l.b16 %v672
    %v923 = vunpack.c.l.b16 %v673
    %v924 = vunpack.c.l.b16 %v674
    %v925 = vunpack.c.l.b16 %v675
    %v926 = vunpack.c.l.b16 %v676
    %v927 = vunpack.c.l.b16 %v677
    %v928 = vunpack.c.l.b16 %v678
    %v929 = vunpack.c.l.b16 %v679
    %v930 = vunpack.c.l.b16 %v680
    %v931 = vunpack.c.l.b16 %v681
    %v932 = vunpack.c.l.b16 %v682
    %v933 = vunpack.c.l.b16 %v683
    %v934 = vunpack.c.l.b16 %v684
    %v935 = vunpack.c.l.b16 %v685
    %v936 = vunpack.c.l.b16 %v686
    %v937 = vunpack.c.l.b16 %v687
    %v938 = vunpack.c.l.b16 %v688
    %v939 = vunpack.c.l.b16 %v689
    %v940 = vunpack.c.l.b16 %v690
    %v941 = vunpack.c.l.b16 %v691
    %v942 = vunpack.c.l.b16 %v692
    %v943 = vunpack.c.l.b16 %v693
    %v944 = vunpack.c.l.b16 %v694
    %v945 = vunpack.c.l.b16 %v695
    %v946 = vunpack.c.l.b16 %v696
    %v947 = vunpack.c.l.b16 %v697
    %v948 = vunpack.c.l.b16 %v698
    %v949 = vunpack.c.l.b16 %v699
    %v950 = vunpack.c.l.b16 %v700
    %v951 = vunpack.c.l.b16 %v701
    %v952 = vunpack.c.l.b16 %v702
    %v953 = vunpack.c.l.b16 %v703
    %v954 = vunpack.c.l.b16 %v704
    %v955 = vunpack.c.l.b16 %v705
    %v956 = vunpack.c.l.b16 %v706
    %v957 = vunpack.c.l.b16 %v707
    %v958 = vunpack.c.l.b16 %v708
    %v959 = vunpack.c.l.b16 %v709
    %v960 = vunpack.c.l.b16 %v710
    %v961 = vunpack.c.l.b16 %v711
    %v962 = vunpack.c.l.b16 %v712
    %v963 = vunpack.c.l.b16 %v713
    %v964 = vunpack.c.l.b16 %v714
    %v965 = vunpack.c.l.b16 %v715
    %v966 = vunpack.c.l.b16 %v716
    %v967 = vunpack.c.l.b16 %v717
    %v968 = vunpack.c.l.b16 %v718
    %v969 = vunpack.c.l.b16 %v719
    %v970 = vunpack.c.l.b16 %v720
    %v971 = vunpack.c.l.b16 %v721
    %v972 = vunpack.c.l.b16 %v722
    %v973 = vunpack.c.l.b16 %v723
    %v974 = vunpack.c.l.b16 %v724
    %v975 = vunpack.c.l.b16 %v725
    %v976 = vunpack.c.l.b16 %v726
    %v977 = vunpack.c.l.b16 %v727
    %v978 = vunpack.c.l.b16 %v728
    %v979 = vunpack.c.l.b16 %v729
    %v980 = vunpack.c.l.b16 %v730
    %v981 = vunpack.c.l.b16 %v731
    %v982 = vunpack.c.l.b16 %v732
    %v983 = vunpack.c.l.b16 %v733
    %v984 = vunpack.c.l.b16 %v734
    %v985 = vunpack.c.l.b16 %v735
    %v986 = vunpack.c.l.b16 %v736
    %v987 = vunpack.c.l.b16 %v737
    %v988 = vunpack.c.l.b16 %v738
    %v989 = vunpack.c.l.b16 %v739
    %v990 = vunpack.c.l.b16 %v740
    %v991 = vunpack.c.l.b16 %v741
    %v992 = vunpack.c.l.b16 %v742
    %v993 = vunpack.c.l.b16 %v743
    %v994 = vunpack.c.l.b16 %v744
    %v995 = vunpack.c.l.b16 %v745
    %v996 = vunpack.c.l.b16 %v746
    %v997 = vunpack.c.l.b16 %v747
    %v998 = vunpack.c.l.b16 %v748
    %v999 = vunpack.c.l.b16 %v749
    %v1000 = vunpack.c.l.b16 %v750
    %v1001 = vunpack.c.l.b16 %v751
    %v1002 = vunpack.c.l.b16 %v752
    %v1003 = vunpack.c.l.b16 %v753
    %v1004 = vunpack.c.l.b16 %v754
    %v1005 = vunpack.c.l.b16 %v755
    %v1006 = vunpack.c.l.b16 %v756
    %v1007 = vunpack.c.l.b16 %v757
    %v1008 = vunpack.c.l.b16 %v758
    %v1009 = vunpack.c.l.b16 %v759
    %v1010 = vunpack.c.l.b16 %v760
    %v1011 = vunpack.c.l.b16 %v761
    %v1012 = vunpack.c.l.b16 %v762
    %v1013 = vunpack.c.l.b16 %v763
    %v1014 = vunpack.c.l.b16 %v764
    %v1015 = vunpack.c.l.b16 %v765
    %v1016 = vunpack.c.l.b16 %v766
    %v1017 = vunpack.c.l.b16 %v767
    %v1018 = vunpack.c.l.b16 %v768
    %v1019 = vunpack.c.l.b16 %v769
    %v1020 = vunpack.c.l.b16 %v770
    %v1021 = vunpack.c.l.b16 %v771
    %v1022 = vunpack.c.l.b16 %v772
    %v1023 = vunpack.c.l.b16 %v773
    %v1024 = vunpack.c.l.b16 %v774
    %v1025 = vunpack.c.l.b16 %v775
    %v1026 = vunpack.c.l.b16 %v776
    %v1027 = vunpack.c.l.b16 %v777
    %v1028 = vunpack.c.l.b16 %v778
    %v1029 = vunpack.c.l.b16 %v779
    %v1030 = vunpack.c.l.b16 %v780
    %v1031 = vunpack.c.l.b16 %v781
    %v1032 = vunpack.c.l.b16 %v782
    %v1033 = vunpack.c.l.b16 %v783
    %v1034 = vunpack.c.l.b16 %v784
    %v1035 = vunpack.c.l.b16 %v785
    %v1036 = vunpack.c.l.b16 %v786
    %v1037 = vunpack.c.l.b16 %v787
    %v1038 = vunpack.c.l.b16 %v788
    %v1039 = vunpack.c.l.b16 %v789
    %v1040 = vunpack.c.l.b16 %v790
    %v1041 = vunpack.c.l.b16 %v791
    %v1042 = vunpack.c.l.b16 %v792
    %v1043 = vunpack.c.l.b16 %v793
    %v1044 = vunpack.c.l.b16 %v794
    %v1045 = vunpack.c.l.b16 %v795
    %v1046 = vpack.c.b16 %v922, %v921
    %v1047 = vpack.c.b16 %v924, %v923
    %v1048 = vpack.c.b16 %v926, %v925
    %v1049 = vpack.c.b16 %v928, %v927
    %v1050 = vpack.c.b16 %v930, %v929
    %v1051 = vpack.c.b16 %v932, %v931
    %v1052 = vpack.c.b16 %v934, %v933
    %v1053 = vpack.c.b16 %v936, %v935
    %v1054 = vpack.c.b16 %v938, %v937
    %v1055 = vpack.c.b16 %v940, %v939
    %v1056 = vpack.c.b16 %v942, %v941
    %v1057 = vpack.c.b16 %v944, %v943
    %v1058 = vpack.c.b16 %v946, %v945
    %v1059 = vpack.c.b16 %v948, %v947
    %v1060 = vpack.c.b16 %v950, %v949
    %v1061 = vpack.c.b16 %v952, %v951
    %v1062 = vpack.c.b16 %v954, %v953
    %v1063 = vpack.c.b16 %v956, %v955
    %v1064 = vpack.c.b16 %v958, %v957
    %v1065 = vpack.c.b16 %v960, %v959
    %v1066 = vpack.c.b16 %v962, %v961
    %v1067 = vpack.c.b16 %v964, %v963
    %v1068 = vpack.c.b16 %v966, %v965
    %v1069 = vpack.c.b16 %v968, %v967
    %v1070 = vpack.c.b16 %v970, %v969
    %v1071 = vpack.c.b16 %v972, %v971
    %v1072 = vpack.c.b16 %v974, %v973
    %v1073 = vpack.c.b16 %v976, %v975
    %v1074 = vpack.c.b16 %v978, %v977
    %v1075 = vpack.c.b16 %v980, %v979
    %v1076 = vpack.c.b16 %v982, %v981
    %v1077 = vpack.c.b16 %v984, %v983
    %v1078 = vpack.c.b16 %v986, %v985
    %v1079 = vpack.c.b16 %v988, %v987
    %v1080 = vpack.c.b16 %v990, %v989
    %v1081 = vpack.c.b16 %v992, %v991
    %v1082 = vpack.c.b16 %v994, %v993
    %v1083 = vpack.c.b16 %v996, %v995
    %v1084 = vpack.c.b16 %v998, %v997
    %v1085 = vpack.c.b16 %v1000, %v999
    %v1086 = vpack.c.b16 %v1002, %v1001
    %v1087 = vpack.c.b16 %v1004, %v1003
    %v1088 = vpack.c.b16 %v1006, %v1005
    %v1089 = vpack.c.b16 %v1008, %v1007
    %v1090 = vpack.c.b16 %v1010, %v1009
    %v1091 = vpack.c.b16 %v1012, %v1011
    %v1092 = vpack.c.b16 %v1014, %v1013
    %v1093 = vpack.c.b16 %v1016, %v1015
    %v1094 = vpack.c.b16 %v1018, %v1017
    %v1095 = vpack.c.b16 %v1020, %v1019
    %v1096 = vpack.c.b16 %v1022, %v1021
    %v1097 = vpack.c.b16 %v1024, %v1023
    %v1098 = vpack.c.b16 %v1026, %v1025
    %v1099 = vpack.c.b16 %v1028, %v1027
    %v1100 = vpack.c.b16 %v1030, %v1029
    %v1101 = vpack.c.b16 %v1032, %v1031
    %v1102 = vpack.c.b16 %v1034, %v1033
    %v1103 = vpack.c.b16 %v1036, %v1035
    %v1104 = vpack.c.b16 %v1038, %v1037
    %v1105 = vpack.c.b16 %v1040, %v1039
    %v1106 = vpack.c.b16 %v1042, %v1041
    %v1107 = vpack.c.b16 %v1044, %v1043
    %v1108 = vpack.c.b16 %v1045, %v1045
    %vm1171 = vcmask 850944
    %v1173 = vsel %vm1171, %v137, 0
    %vm1175 = vcmask 1043456
    %v1177 = vsel %vm1175, %v1108, 0
    %1179 = vmatprep.subr.bf16.mxu0 0
    %1180 = vmatpush1.bf16.msra.mxu0 %v1053
    %1181 = vmatprep.subr.bf16.mxu0 0
    %1182 = vmatpush1.bf16.msra.mxu0 %v1052
    %1183 = vmatprep.subr.bf16.mxu0 0
    %1184 = vmatpush1.bf16.msra.mxu0 %v1051
    %1185 = vmatprep.subr.bf16.mxu0 0
    %1186 = vmatpush1.bf16.msra.mxu0 %v1050
    %1187 = vmatprep.subr.bf16.mxu0 0
    %1188 = vmatpush1.bf16.msra.mxu0 %v1049
    %1189 = vmatprep.subr.bf16.mxu0 0
    %1190 = vmatpush1.bf16.msra.mxu0 %v1048
    %1191 = vmatprep.subr.bf16.mxu0 0
    %1192 = vmatpush1.bf16.msra.mxu0 %v1047
    %1193 = vmatprep.subr.bf16.mxu0 0
    %1194 = vmatpush1.bf16.msra.mxu0 %v1046
    %1195 = vmatprep.subr.bf16.mxu0 0
    %1196 = vmatpush2.bf16.msra.mxu0 %v1061
    %1197 = vmatprep.subr.bf16.mxu0 0
    %1198 = vmatpush2.bf16.msra.mxu0 %v1060
    %1199 = vmatprep.subr.bf16.mxu0 0
    %1200 = vmatpush2.bf16.msra.mxu0 %v1059
    %1201 = vmatprep.subr.bf16.mxu0 0
    %1202 = vmatpush2.bf16.msra.mxu0 %v1058
    %1203 = vmatprep.subr.bf16.mxu0 0
    %1204 = vmatpush2.bf16.msra.mxu0 %v1057
    %1205 = vmatprep.subr.bf16.mxu0 0
    %1206 = vmatpush2.bf16.msra.mxu0 %v1056
    %1207 = vmatprep.subr.bf16.mxu0 0
    %1208 = vmatpush2.bf16.msra.mxu0 %v1055
    %1209 = vmatprep.subr.bf16.mxu0 0
    %1210 = vmatpush2.bf16.msra.mxu0 %v1054
    %1211 = vmatprep.mubr.bf16.mxu0 %v131
    %1212 = vmatmul.mubr.bf16.gmra.mxu0 %v130
    %v1213 = vpop.f32.mrf.mxu0
    %v1214 = vadd.f32 0.0, %v1213
    %v1215 = vpop.f32.mrf.mxu0
    %v1216 = vpop.f32.mrf.mxu0
    %v1217 = vadd.f32 0.0, %v1216
    %v1218 = vpop.f32.mrf.mxu0
    %1219 = vdwg.mxu0
    %1220 = vmatprep.subr.bf16.mxu0 0
    %1221 = vmatpush1.bf16.msra.mxu0 %v1069
    %1222 = vmatprep.subr.bf16.mxu0 0
    %1223 = vmatpush1.bf16.msra.mxu0 %v1068
    %1224 = vmatprep.subr.bf16.mxu0 0
    %1225 = vmatpush1.bf16.msra.mxu0 %v1067
    %1226 = vmatprep.subr.bf16.mxu0 0
    %1227 = vmatpush1.bf16.msra.mxu0 %v1066
    %1228 = vmatprep.subr.bf16.mxu0 0
    %1229 = vmatpush1.bf16.msra.mxu0 %v1065
    %1230 = vmatprep.subr.bf16.mxu0 0
    %1231 = vmatpush1.bf16.msra.mxu0 %v1064
    %1232 = vmatprep.subr.bf16.mxu0 0
    %1233 = vmatpush1.bf16.msra.mxu0 %v1063
    %1234 = vmatprep.subr.bf16.mxu0 0
    %1235 = vmatpush1.bf16.msra.mxu0 %v1062
    %1236 = vmatprep.subr.bf16.mxu0 0
    %1237 = vmatpush2.bf16.msra.mxu0 %v1077
    %1238 = vmatprep.subr.bf16.mxu0 0
    %1239 = vmatpush2.bf16.msra.mxu0 %v1076
    %1240 = vmatprep.subr.bf16.mxu0 0
    %1241 = vmatpush2.bf16.msra.mxu0 %v1075
    %1242 = vmatprep.subr.bf16.mxu0 0
    %1243 = vmatpush2.bf16.msra.mxu0 %v1074
    %1244 = vmatprep.subr.bf16.mxu0 0
    %1245 = vmatpush2.bf16.msra.mxu0 %v1073
    %1246 = vmatprep.subr.bf16.mxu0 0
    %1247 = vmatpush2.bf16.msra.mxu0 %v1072
    %1248 = vmatprep.subr.bf16.mxu0 0
    %1249 = vmatpush2.bf16.msra.mxu0 %v1071
    %1250 = vmatprep.subr.bf16.mxu0 0
    %1251 = vmatpush2.bf16.msra.mxu0 %v1070
    %1252 = vmatprep.mubr.bf16.mxu0 %v133
    %1253 = vmatmul.mubr.bf16.gmra.mxu0 %v132
    %v1254 = vpop.f32.mrf.mxu0
    %v1255 = vadd.f32 %v1214, %v1254
    %v1256 = vpop.f32.mrf.mxu0
    %v1257 = vpop.f32.mrf.mxu0
    %v1258 = vadd.f32 %v1217, %v1257
    %v1259 = vpop.f32.mrf.mxu0
    %1260 = vdwg.mxu0
    %1261 = vmatprep.subr.bf16.mxu0 0
    %1262 = vmatpush1.bf16.msra.mxu0 %v1085
    %1263 = vmatprep.subr.bf16.mxu0 0
    %1264 = vmatpush1.bf16.msra.mxu0 %v1084
    %1265 = vmatprep.subr.bf16.mxu0 0
    %1266 = vmatpush1.bf16.msra.mxu0 %v1083
    %1267 = vmatprep.subr.bf16.mxu0 0
    %1268 = vmatpush1.bf16.msra.mxu0 %v1082
    %1269 = vmatprep.subr.bf16.mxu0 0
    %1270 = vmatpush1.bf16.msra.mxu0 %v1081
    %1271 = vmatprep.subr.bf16.mxu0 0
    %1272 = vmatpush1.bf16.msra.mxu0 %v1080
    %1273 = vmatprep.subr.bf16.mxu0 0
    %1274 = vmatpush1.bf16.msra.mxu0 %v1079
    %1275 = vmatprep.subr.bf16.mxu0 0
    %1276 = vmatpush1.bf16.msra.mxu0 %v1078
    %1277 = vmatprep.subr.bf16.mxu0 0
    %1278 = vmatpush2.bf16.msra.mxu0 %v1093
    %1279 = vmatprep.subr.bf16.mxu0 0
    %1280 = vmatpush2.bf16.msra.mxu0 %v1092
    %1281 = vmatprep.subr.bf16.mxu0 0
    %1282 = vmatpush2.bf16.msra.mxu0 %v1091
    %1283 = vmatprep.subr.bf16.mxu0 0
    %1284 = vmatpush2.bf16.msra.mxu0 %v1090
    %1285 = vmatprep.subr.bf16.mxu0 0
    %1286 = vmatpush2.bf16.msra.mxu0 %v1089
    %1287 = vmatprep.subr.bf16.mxu0 0
    %1288 = vmatpush2.bf16.msra.mxu0 %v1088
    %1289 = vmatprep.subr.bf16.mxu0 0
    %1290 = vmatpush2.bf16.msra.mxu0 %v1087
    %1291 = vmatprep.subr.bf16.mxu0 0
    %1292 = vmatpush2.bf16.msra.mxu0 %v1086
    %1293 = vmatprep.mubr.bf16.mxu0 %v135
    %1294 = vmatmul.mubr.bf16.gmra.mxu0 %v134
    %v1295 = vpop.f32.mrf.mxu0
    %v1296 = vadd.f32 %v1255, %v1295
    %v1297 = vpop.f32.mrf.mxu0
    %v1298 = vpop.f32.mrf.mxu0
    %v1299 = vadd.f32 %v1258, %v1298
    %v1300 = vpop.f32.mrf.mxu0
    %1301 = vdwg.mxu0
    %1302 = vmatprep.subr.bf16.mxu0 0
    %1303 = vmatpush1.bf16.msra.mxu0 %v1101
    %1304 = vmatprep.subr.bf16.mxu0 0
    %1305 = vmatpush1.bf16.msra.mxu0 %v1100
    %1306 = vmatprep.subr.bf16.mxu0 0
    %1307 = vmatpush1.bf16.msra.mxu0 %v1099
    %1308 = vmatprep.subr.bf16.mxu0 0
    %1309 = vmatpush1.bf16.msra.mxu0 %v1098
    %1310 = vmatprep.subr.bf16.mxu0 0
    %1311 = vmatpush1.bf16.msra.mxu0 %v1097
    %1312 = vmatprep.subr.bf16.mxu0 0
    %1313 = vmatpush1.bf16.msra.mxu0 %v1096
    %1314 = vmatprep.subr.bf16.mxu0 0
    %1315 = vmatpush1.bf16.msra.mxu0 %v1095
    %1316 = vmatprep.subr.bf16.mxu0 0
    %1317 = vmatpush1.bf16.msra.mxu0 %v1094
    %1318 = vmatprep.subr.bf16.mxu0 0
    %1319 = vmatpush2.bf16.msra.mxu0 0
    %1320 = vmatprep.subr.bf16.mxu0 0
    %1321 = vmatpush2.bf16.msra.mxu0 %v1177
    %1322 = vmatprep.subr.bf16.mxu0 0
    %1323 = vmatpush2.bf16.msra.mxu0 %v1107
    %1324 = vmatprep.subr.bf16.mxu0 0
    %1325 = vmatpush2.bf16.msra.mxu0 %v1106
    %1326 = vmatprep.subr.bf16.mxu0 0
    %1327 = vmatpush2.bf16.msra.mxu0 %v1105
    %1328 = vmatprep.subr.bf16.mxu0 0
    %1329 = vmatpush2.bf16.msra.mxu0 %v1104
    %1330 = vmatprep.subr.bf16.mxu0 0
    %1331 = vmatpush2.bf16.msra.mxu0 %v1103
    %1332 = vmatprep.subr.bf16.mxu0 0
    %1333 = vmatpush2.bf16.msra.mxu0 %v1102
    %1334 = vmatprep.mubr.bf16.mxu0 %v1173
    %1335 = vmatmul.mubr.bf16.gmra.mxu0 %v136
    %v1336 = vpop.f32.mrf.mxu0
    %v1337 = vadd.f32 %v1296, %v1336
    %v1338 = vpop.f32.mrf.mxu0
    %v1339 = vpop.f32.mrf.mxu0
    %v1340 = vadd.f32 %v1299, %v1339
    %v1341 = vpop.f32.mrf.mxu0
    %1342 = vdwg.mxu0
    %v1359 = vunpack.c.l.b16 %v655
    %v1360 = vunpack.c.l.b16 %v656
    %v1361 = vunpack.c.l.b16 %v657
    %v1362 = vunpack.c.l.b16 %v658
    %v1363 = vunpack.c.l.b16 %v659
    %v1364 = vunpack.c.l.b16 %v660
    %v1365 = vunpack.c.l.b16 %v661
    %v1366 = vunpack.c.l.b16 %v662
    %v1367 = vunpack.c.l.b16 %v663
    %v1368 = vunpack.c.l.b16 %v664
    %v1369 = vunpack.c.l.b16 %v665
    %v1370 = vunpack.c.l.b16 %v666
    %v1371 = vunpack.c.l.b16 %v667
    %v1372 = vunpack.c.l.b16 %v668
    %v1373 = vunpack.c.l.b16 %v669
    %v1374 = vunpack.c.l.b16 %v670
    %v1375 = vpack.c.b16 %v1360, %v1359
    %v1376 = vpack.c.b16 %v1362, %v1361
    %v1377 = vpack.c.b16 %v1364, %v1363
    %v1378 = vpack.c.b16 %v1366, %v1365
    %v1379 = vpack.c.b16 %v1368, %v1367
    %v1380 = vpack.c.b16 %v1370, %v1369
    %v1381 = vpack.c.b16 %v1372, %v1371
    %v1382 = vpack.c.b16 %v1374, %v1373
    %1391 = vmatprep.subr.bf16.mxu0 0
    %1392 = vmatpush1.bf16.msra.mxu0 %v1382
    %1393 = vmatprep.subr.bf16.mxu0 0
    %1394 = vmatpush1.bf16.msra.mxu0 %v1381
    %1395 = vmatprep.subr.bf16.mxu0 0
    %1396 = vmatpush1.bf16.msra.mxu0 %v1380
    %1397 = vmatprep.subr.bf16.mxu0 0
    %1398 = vmatpush1.bf16.msra.mxu0 %v1379
    %1399 = vmatprep.subr.bf16.mxu0 0
    %1400 = vmatpush1.bf16.msra.mxu0 %v1378
    %1401 = vmatprep.subr.bf16.mxu0 0
    %1402 = vmatpush1.bf16.msra.mxu0 %v1377
    %1403 = vmatprep.subr.bf16.mxu0 0
    %1404 = vmatpush1.bf16.msra.mxu0 %v1376
    %1405 = vmatprep.subr.bf16.mxu0 0
    %1406 = vmatpush1.bf16.msra.mxu0 %v1375
    %1407 = vmatprep.subr.bf16.mxu0 0
    %1408 = vmatpush2.bf16.msra.mxu0 0
    %1409 = vmatprep.subr.bf16.mxu0 0
    %1410 = vmatpush2.bf16.msra.mxu0 0
    %1411 = vmatprep.subr.bf16.mxu0 0
    %1412 = vmatpush2.bf16.msra.mxu0 0
    %1413 = vmatprep.subr.bf16.mxu0 0
    %1414 = vmatpush2.bf16.msra.mxu0 0
    %1415 = vmatprep.subr.bf16.mxu0 0
    %1416 = vmatpush2.bf16.msra.mxu0 0
    %1417 = vmatprep.subr.bf16.mxu0 0
    %1418 = vmatpush2.bf16.msra.mxu0 0
    %1419 = vmatprep.subr.bf16.mxu0 0
    %1420 = vmatpush2.bf16.msra.mxu0 0
    %1421 = vmatprep.subr.bf16.mxu0 0
    %1422 = vmatpush2.bf16.msra.mxu0 0
    %1423 = vmatprep.mubr.bf16.mxu0 0
    %1424 = vmatmul.mubr.bf16.gmra.mxu0 %v654
    %v1425 = vpop.f32.mrf.mxu0
    %v1426 = vadd.f32 %v1337, %v1425
    %v1427 = vpop.f32.mrf.mxu0
    %v1428 = vpop.f32.mrf.mxu0
    %v1429 = vadd.f32 %v1340, %v1428
    %v1430 = vpop.f32.mrf.mxu0
    %1431 = vdwg.mxu0
    %v1432 = vld [vmem:[%s6] sm:$0x1]
    %v1434 = vlaneseq
    %v1435 = vshrl.u32 %v1434, 7
    %v1436 = vsub.s32 0, %v1435
    %v1437 = vrot.slane %v1432, %v1436
    %v1439 = vadd.f32 %v1426, %v1437
    %v1440 = vadd.f32 %v1429, %v1437
    %v1441 = vpack.c.bf16 %v1440, %v1439
    %v1443 = vunpack.c.l.b16 %v1441
    %v1444 = vunpack.c.h.b16 %v1441
    %v1445 = vpack.c.b16 %v1443, %v1443
    %v1446 = vpack.c.b16 %v1444, %v1444
    %1449 = vst [vmem:[#allocation11] sm:$0xf] %v1445
    %1450 = vst [vmem:[#allocation11 + $0x4] sm:$0xf] %v1446
    // Predicated region
    $region50: #{tpu_custom_call.1} parent=1 // pred_check
      _
    $region51: #{tpu_custom_call.1} parent=1 // pred_check_branch
      %1452 = sbr.rel (0) target = $region53
    $region52: #{tpu_custom_call.1} parent=1 // pred_region
      %s1454 = ssub.s32 128, 64
      %1455 = vsyncadd [#allocation4], %s1454
      %s1456 = sshll.u32 [#allocation11], 4
      %s1457 = int_to_ptr.vmem [resolvable:$true] %s1456
      %1462 = dma.vmem_to_hbm [thread:$0]  %s1457, 64, %s7, [#allocation4], 64, 64, 4
    $region53: #{tpu_custom_call.1} parent=1 // pred_fallthru
      _
    // Predicated region
    $region54: #{tpu_custom_call.1} parent=1 // pred_check
      _
    $region55: #{tpu_custom_call.1} parent=1 // pred_check_branch
      %1464 = sbr.rel (0) target = $region57
    $region56: #{tpu_custom_call.1} parent=1 // pred_region
      %1465 = dma.done [#allocation4], 128
    $region57: #{tpu_custom_call.1} parent=1 // pred_fallthru
      _
    %1466 = vsyncpa [#allocation3], 1
    %1467 = vsyncpa [#allocation6], 1
    %1468 = vsyncpa [#allocation9], 1
    %1469 = vsyncpa [#allocation4], 1

</llo_original>
